<compile_context>
chip_gen: v6e
topology: v6e:2x2x1
jax: 0.10.0
libtpu: 0.0.40
codegen_flags: <defaults>
</compile_context>

<pallas_src>
import jax
import jax.numpy as jnp
from jax.experimental import pallas as pl
from jax.experimental.pallas import tpu as pltpu

HIDDEN = 16
INPUT = 1
OUTPUT = 1
SEQ_LEN = 5
BATCH = 1


def pack_params(w_ih, w_hh, b_ih, b_hh, w_fc, b_fc):
    """One-time (module-build) parameter preparation.

    Returns:
      packed: (hidden + 3, hidden) f32
        rows [0:H]   = W_hh^T
        row  H       = W_ih row (input_size == 1)
        row  H + 1   = b_ih + b_hh
        row  H + 2   = fc weight row (output_size == 1)
      b_fc_s: (1,) f32 fc bias scalar (SMEM operand)
    """
    hidden = w_hh.shape[0]
    assert w_hh.shape == (hidden, hidden)
    assert w_ih.shape == (hidden, INPUT)
    assert w_fc.shape == (OUTPUT, hidden)
    packed = jnp.concatenate(
        [
            w_hh.T.astype(jnp.float32),                               # (H, H)
            w_ih.reshape(1, hidden).astype(jnp.float32),              # (1, H)
            (b_ih + b_hh).reshape(1, hidden).astype(jnp.float32),     # (1, H)
            w_fc.reshape(1, hidden).astype(jnp.float32),              # (1, H)
        ],
        axis=0,
    )                                                                 # (H+3, H)
    b_fc_s = b_fc.reshape(1).astype(jnp.float32)
    return packed, b_fc_s


def simple_rnn_forward(x, packed, b_fc_s):
    """x: (seq_len, batch, input_size) f32; returns (seq_len, batch, output).

    Matches torch: h_t = tanh(x_t @ W_ih^T + b_ih + h_{t-1} @ W_hh^T + b_hh),
                   out_t = h_t @ W_fc^T + b_fc, with h_0 = 0.
    """
    seq_len, batch, input_size = x.shape
    hidden = packed.shape[1]
    # Kernel is specialized to the module's sizes; fail loudly otherwise.
    assert batch == 1, "kernel specialization requires batch == 1"
    assert input_size == 1, "kernel specialization requires input_size == 1"
    assert packed.shape == (hidden + 3, hidden)

    def rnn_kernel(x_s_ref, params_ref, b_fc_ref, out_ref):
        # x_s_ref:    SMEM (seq_len,)           input scalars (input_size == 1)
        # params_ref: VMEM (hidden+3, hidden)   packed parameters (see pack_params)
        # b_fc_ref:   SMEM (1,)                 fc bias scalar
        # out_ref:    VMEM (1, seq_len)         lane-dense outputs, single store
        w_hh_t = params_ref[0:hidden, :]               # (H, H)  W_hh^T
        w_ih = params_ref[hidden:hidden + 1, :]        # (1, H)  W_ih row
        b = params_ref[hidden + 1:hidden + 2, :]       # (1, H)  b_ih + b_hh
        w_fc = params_ref[hidden + 2:hidden + 3, :]    # (1, H)  fc weight row

        # Hoisted input contribution: independent of the recurrence, so the
        # scheduler can hide these scalar reads / broadcast-mults under step 0.
        pre_base = [x_s_ref[t] * w_ih + b for t in range(seq_len)]

        hs = []
        h = jnp.tanh(pre_base[0])                      # h_0 == 0: skip matvec
        hs.append(h)
        for t in range(1, seq_len):                    # static unroll (seq_len == 5)
            pre = pre_base[t] + jnp.dot(h, w_hh_t,
                                        preferred_element_type=jnp.float32)
            h = jnp.tanh(pre)                          # (1, H)
            hs.append(h)

        # fc for all steps at once, entirely in vregs (no VMEM round-trip):
        # contract hidden -> lane-dense (1, seq_len).
        h_all = jnp.concatenate(hs, axis=0)            # (S, H)
        out = jnp.einsum("oh,th->ot", w_fc, h_all,
                         preferred_element_type=jnp.float32)   # (1, S)
        out_ref[...] = out + b_fc_ref[0]               # single lane-dense store

    vmem = pl.BlockSpec(memory_space=pltpu.MemorySpace.VMEM)
    smem = pl.BlockSpec(memory_space=pltpu.MemorySpace.SMEM)

    out_row = pl.pallas_call(
        rnn_kernel,
        out_shape=jax.ShapeDtypeStruct((1, seq_len), jnp.float32),
        in_specs=[smem, vmem, smem],
        out_specs=vmem,
    )(
        x.reshape(seq_len).astype(jnp.float32),        # (S,)      SMEM
        packed,                                        # (H+3, H)  VMEM (one DMA)
        b_fc_s,                                        # (1,)      SMEM
    )
    # (1, seq_len) -> (seq_len, batch=1, output=1), PyTorch batch_first=False.
    return out_row.reshape(seq_len, 1, 1)


def reference_forward(x, w_ih, w_hh, b_ih, b_hh, w_fc, b_fc):
    """Pure-JAX reference matching torch nn.RNN(tanh) + nn.Linear semantics."""
    seq_len, batch, _ = x.shape
    h = jnp.zeros((batch, HIDDEN), jnp.float32)
    outs = []
    for t in range(seq_len):
        h = jnp.tanh(x[t] @ w_ih.T + b_ih + h @ w_hh.T + b_hh)
        outs.append(h @ w_fc.T + b_fc)
    return jnp.stack(outs, axis=0)


if __name__ == "__main__":
    # Deterministic parameter init (PyTorch-style U(-1/sqrt(H), 1/sqrt(H))).
    key = jax.random.PRNGKey(0)
    ks = jax.random.split(key, 6)
    bound = 1.0 / float(jnp.sqrt(HIDDEN))
    w_ih = jax.random.uniform(ks[0], (HIDDEN, INPUT), jnp.float32, -bound, bound)
    w_hh = jax.random.uniform(ks[1], (HIDDEN, HIDDEN), jnp.float32, -bound, bound)
    b_ih = jax.random.uniform(ks[2], (HIDDEN,), jnp.float32, -bound, bound)
    b_hh = jax.random.uniform(ks[3], (HIDDEN,), jnp.float32, -bound, bound)
    w_fc = jax.random.uniform(ks[4], (OUTPUT, HIDDEN), jnp.float32, -bound, bound)
    b_fc = jax.random.uniform(ks[5], (OUTPUT,), jnp.float32, -bound, bound)

    # x = FloatTensor([0..4]).view(seq_len, 1, 1)
    x = jnp.arange(SEQ_LEN, dtype=jnp.float32).reshape(SEQ_LEN, BATCH, INPUT)

    # Parameter prep done ONCE, off the per-call path (perf-review item).
    packed, b_fc_s = pack_params(w_ih, w_hh, b_ih, b_hh, w_fc, b_fc)
    forward = jax.jit(simple_rnn_forward)

    out = forward(x, packed, b_fc_s)
    out = jax.block_until_ready(out)

    ref = reference_forward(x, w_ih, w_hh, b_ih, b_hh, w_fc, b_fc)
    assert out.shape == (SEQ_LEN, BATCH, OUTPUT)
    assert jnp.allclose(out, ref, atol=1e-5, rtol=1e-4)
    print("KERNEL_OK")
</pallas_src>

<mosaic_0001>
module attributes {stable_mosaic.version = 11 : i64} {
  func.func @rnn_kernel(%arg0: memref<5xf32, #tpu.memory_space<smem>>, %arg1: memref<19x16xf32, #tpu.memory_space<vmem>>, %arg2: memref<1xf32, #tpu.memory_space<smem>>, %arg3: memref<1x5xf32, #tpu.memory_space<vmem>>) attributes {dimension_semantics = [], scalar_prefetch = 0 : i64, scratch_operands = 0 : i64, tpu.core_type = #tpu.core_type<tc>} {
    %c0 = arith.constant 0 : index
    %c0_0 = arith.constant 0 : index
    %0 = vector.load %arg1[%c0, %c0_0] : memref<19x16xf32, #tpu.memory_space<vmem>>, vector<16x16xf32>
    %c16 = arith.constant 16 : index
    %c0_1 = arith.constant 0 : index
    %1 = vector.load %arg1[%c16, %c0_1] : memref<19x16xf32, #tpu.memory_space<vmem>>, vector<1x16xf32>
    %c17 = arith.constant 17 : index
    %c0_2 = arith.constant 0 : index
    %2 = vector.load %arg1[%c17, %c0_2] : memref<19x16xf32, #tpu.memory_space<vmem>>, vector<1x16xf32>
    %c18 = arith.constant 18 : index
    %c0_3 = arith.constant 0 : index
    %3 = vector.load %arg1[%c18, %c0_3] : memref<19x16xf32, #tpu.memory_space<vmem>>, vector<1x16xf32>
    %c0_4 = arith.constant 0 : index
    %4 = memref.load %arg0[%c0_4] : memref<5xf32, #tpu.memory_space<smem>>
    %5 = vector.broadcast %4 : f32 to vector<1x16xf32>
    %6 = arith.mulf %5, %1 : vector<1x16xf32>
    %7 = arith.addf %6, %2 : vector<1x16xf32>
    %c1 = arith.constant 1 : index
    %8 = memref.load %arg0[%c1] : memref<5xf32, #tpu.memory_space<smem>>
    %9 = vector.broadcast %8 : f32 to vector<1x16xf32>
    %10 = arith.mulf %9, %1 : vector<1x16xf32>
    %11 = arith.addf %10, %2 : vector<1x16xf32>
    %c2 = arith.constant 2 : index
    %12 = memref.load %arg0[%c2] : memref<5xf32, #tpu.memory_space<smem>>
    %13 = vector.broadcast %12 : f32 to vector<1x16xf32>
    %14 = arith.mulf %13, %1 : vector<1x16xf32>
    %15 = arith.addf %14, %2 : vector<1x16xf32>
    %c3 = arith.constant 3 : index
    %16 = memref.load %arg0[%c3] : memref<5xf32, #tpu.memory_space<smem>>
    %17 = vector.broadcast %16 : f32 to vector<1x16xf32>
    %18 = arith.mulf %17, %1 : vector<1x16xf32>
    %19 = arith.addf %18, %2 : vector<1x16xf32>
    %c4 = arith.constant 4 : index
    %20 = memref.load %arg0[%c4] : memref<5xf32, #tpu.memory_space<smem>>
    %21 = vector.broadcast %20 : f32 to vector<1x16xf32>
    %22 = arith.mulf %21, %1 : vector<1x16xf32>
    %23 = arith.addf %22, %2 : vector<1x16xf32>
    %24 = math.tanh %7 : vector<1x16xf32>
    %cst = arith.constant dense<0.000000e+00> : vector<1x16xf32>
    %25 = tpu.matmul %24, %0, %cst {dimension_numbers = #tpu.dot_dimension_numbers<[1], [0], [0], [1], [0, 0, 1, 1], [], []>} : vector<1x16xf32>, vector<16x16xf32>, vector<1x16xf32> -> vector<1x16xf32>
    %26 = arith.addf %11, %25 : vector<1x16xf32>
    %27 = math.tanh %26 : vector<1x16xf32>
    %cst_5 = arith.constant dense<0.000000e+00> : vector<1x16xf32>
    %28 = tpu.matmul %27, %0, %cst_5 {dimension_numbers = #tpu.dot_dimension_numbers<[1], [0], [0], [1], [0, 0, 1, 1], [], []>} : vector<1x16xf32>, vector<16x16xf32>, vector<1x16xf32> -> vector<1x16xf32>
    %29 = arith.addf %15, %28 : vector<1x16xf32>
    %30 = math.tanh %29 : vector<1x16xf32>
    %cst_6 = arith.constant dense<0.000000e+00> : vector<1x16xf32>
    %31 = tpu.matmul %30, %0, %cst_6 {dimension_numbers = #tpu.dot_dimension_numbers<[1], [0], [0], [1], [0, 0, 1, 1], [], []>} : vector<1x16xf32>, vector<16x16xf32>, vector<1x16xf32> -> vector<1x16xf32>
    %32 = arith.addf %19, %31 : vector<1x16xf32>
    %33 = math.tanh %32 : vector<1x16xf32>
    %cst_7 = arith.constant dense<0.000000e+00> : vector<1x16xf32>
    %34 = tpu.matmul %33, %0, %cst_7 {dimension_numbers = #tpu.dot_dimension_numbers<[1], [0], [0], [1], [0, 0, 1, 1], [], []>} : vector<1x16xf32>, vector<16x16xf32>, vector<1x16xf32> -> vector<1x16xf32>
    %35 = arith.addf %23, %34 : vector<1x16xf32>
    %36 = math.tanh %35 : vector<1x16xf32>
    %37 = tpu.concatenate %24, %27, %30, %33, %36 in 0 : vector<1x16xf32>, vector<1x16xf32>, vector<1x16xf32>, vector<1x16xf32>, vector<1x16xf32> -> vector<5x16xf32>
    "tpu.trace_start"() <{level = 10 : i32, message = "oh,th->ot"}> : () -> ()
    %cst_8 = arith.constant dense<0.000000e+00> : vector<1x5xf32>
    %38 = tpu.matmul %3, %37, %cst_8 {dimension_numbers = #tpu.dot_dimension_numbers<[1], [1], [0], [0], [0, 0, 1, 0], [], []>} : vector<1x16xf32>, vector<5x16xf32>, vector<1x5xf32> -> vector<1x5xf32>
    "tpu.trace_stop"() : () -> ()
    %c0_9 = arith.constant 0 : index
    %39 = memref.load %arg2[%c0_9] : memref<1xf32, #tpu.memory_space<smem>>
    %40 = vector.broadcast %39 : f32 to vector<1x5xf32>
    %41 = arith.addf %38, %40 : vector<1x5xf32>
    %c0_10 = arith.constant 0 : index
    %c0_11 = arith.constant 0 : index
    %42 = vector.load %arg3[%c0_10, %c0_11] : memref<1x5xf32, #tpu.memory_space<vmem>>, vector<1x5xf32>
    tpu.vector_store %arg3[%c0_10, %c0_11], %41 {strides = array<i32>} : memref<1x5xf32, #tpu.memory_space<vmem>>, vector<1x5xf32>,
    return
  }
}

</mosaic_0001>

<llo_original>
// kernel: simple_rnn_forward.1
$region0: #{simple_rnn_forward.1}
  #allocation0 [shape = 'u32[]', space=smem, size = 0x4, offset = 0x4, fixed_abs, tag = 'smem constant byte address 0x4 - core index']
  #allocation1 [shape = 'u32[144,128]{1,0:T(1,128)}', space=vmem, size = 0x12000, scoped, tag = 'internal scratch']
  #allocation2 [shape = 'f32[1]{0:T(128)S(6)}', space=smem, size = 0x200, scoped, tag = 'scoped memory for simple_rnn_forward.1']
  %s0 = inlined_call_operand.vmem [shape: f32[5], index: 0, kind: input, shape index: {}]
  %s1 = inlined_call_operand.vmem [shape: f32[19,16], index: 1, kind: input, shape index: {}]
  %s2 = inlined_call_operand.<no memory space> [shape: f32[1], index: 2, kind: input, shape index: {}]
  %s3 = inlined_call_operand.hbm [shape: f32[1,5], index: 3, kind: output, shape index: {}]
  %s4 = sld [smem:[#allocation0]]
  $region26: #{simple_rnn_forward.1} parent=0
    _
  %s6 = ssub.s32 1, %s4
  %s7 = scalar_select 0, %s6, %s4
  %8 = sst [smem:[#allocation2]] %s2
  $region1: #{simple_rnn_forward.1} parent=0
    #allocation3 [shape = 'u8[512]{0}', space=smem, size = 0x200, scoped, tag = 'input window, operand 0, single buffered']
    #allocation4 [shape = 's32[1]{0}', space=sflag, size = 0x4, scoped, tag = 'scoped memory for simple_rnn_forward.1']
    #allocation5 [shape = 's32[1]{0}', space=sflag, size = 0x4, scoped, tag = 'scoped memory for simple_rnn_forward.1']
    #allocation6 [shape = 'u8[512]{0}', space=vmem, size = 0x400, scoped, tag = 'output window, operand 0, single buffered']
    %9 = vsyncpa [#allocation5], 0
    %10 = vsyncpa [#allocation4], 0
    // Predicated region
    $region2: #{simple_rnn_forward.1} parent=1 // pred_check
      _
    $region3: #{simple_rnn_forward.1} parent=1 // pred_check_branch
      %12 = sbr.rel (0) target = $region5
    $region4: #{simple_rnn_forward.1} parent=1 // pred_region
      %s14 = ssub.s32 16, 16
      %15 = vsyncadd [#allocation5], %s14
      %s17 = sshll.u32 %s0, 4
      %s18 = int_to_ptr.vmem [resolvable:$true] %s17
      %20 = dma.vmem_to_smem %s18, 16, [#allocation3], [#allocation5]
    $region5: #{simple_rnn_forward.1} parent=1 // pred_fallthru
      _
    // Predicated region
    $region6: #{simple_rnn_forward.1} parent=1 // pred_check
      _
    $region7: #{simple_rnn_forward.1} parent=1 // pred_check_branch
      %22 = sbr.rel (0) target = $region9
    $region8: #{simple_rnn_forward.1} parent=1 // pred_region
      _
    $region9: #{simple_rnn_forward.1} parent=1 // pred_fallthru
      _
    // Predicated region
    $region10: #{simple_rnn_forward.1} parent=1 // pred_check
      _
    $region11: #{simple_rnn_forward.1} parent=1 // pred_check_branch
      %24 = sbr.rel (0) target = $region13
    $region12: #{simple_rnn_forward.1} parent=1 // pred_region
      _
    $region13: #{simple_rnn_forward.1} parent=1 // pred_fallthru
      _
    // Predicated region
    $region14: #{simple_rnn_forward.1} parent=1 // pred_check
      _
    $region15: #{simple_rnn_forward.1} parent=1 // pred_check_branch
      %26 = sbr.rel (0) target = $region17
    $region16: #{simple_rnn_forward.1} parent=1 // pred_region
      %27 = dma.done [#allocation5], 16
    $region17: #{simple_rnn_forward.1} parent=1 // pred_fallthru
      _
    %28 = sfence
    %v29 = vld [vmem:[%s1] sm:$0xff]
    %v30 = vld [vmem:[%s1 + $0x8] sm:$0xff]
    %v31 = vld [vmem:[%s1 + $0x10] sm:$0x1]
    %v32 = vld [vmem:[%s1 + $0x11] sm:$0x1]
    %v33 = vld [vmem:[%s1 + $0x12] sm:$0x1]
    %s34 = sld [smem:[#allocation3]]
    %v35 = vstv %s34
    %v36 = vmul.f32 %v35, %v31
    %v37 = vadd.f32 %v36, %v32
    %s38 = sld [smem:[#allocation3 + $0x1]]
    %v39 = vstv %s38
    %v40 = vmul.f32 %v39, %v31
    %v41 = vadd.f32 %v40, %v32
    %s42 = sld [smem:[#allocation3 + $0x2]]
    %v43 = vstv %s42
    %v44 = vmul.f32 %v43, %v31
    %v45 = vadd.f32 %v44, %v32
    %s46 = sld [smem:[#allocation3 + $0x3]]
    %v47 = vstv %s46
    %v48 = vmul.f32 %v47, %v31
    %v49 = vadd.f32 %v48, %v32
    %s50 = sld [smem:[#allocation3 + $0x4]]
    %v51 = vstv %s50
    %v52 = vmul.f32 %v51, %v31
    %v53 = vadd.f32 %v52, %v32
    %v54 = vtanh.pop %v37
    %vm55 = vcmask 130048
    %v57 = vsel %vm55, %v54, 0
    %59 = vmatprep.subr.mxu0 0.0
    %60 = vmatpush1.msra.mxu0 0.0
    %61 = vmatprep.subr.mxu0 0.0
    %62 = vmatpush1.msra.mxu0 0.0
    %63 = vmatprep.subr.mxu0 0.0
    %64 = vmatpush1.msra.mxu0 0.0
    %65 = vmatprep.subr.mxu0 0.0
    %66 = vmatpush1.msra.mxu0 0.0
    %67 = vmatprep.subr.mxu0 0.0
    %68 = vmatpush1.msra.mxu0 0.0
    %69 = vmatprep.subr.mxu0 0.0
    %70 = vmatpush1.msra.mxu0 0.0
    %71 = vmatprep.subr.mxu0 0.0
    %72 = vmatpush1.msra.mxu0 0.0
    %73 = vmatprep.subr.mxu0 0.0
    %74 = vmatpush1.msra.mxu0 0.0
    %75 = vmatprep.subr.mxu0 0.0
    %76 = vmatpush1.msra.mxu0 0.0
    %77 = vmatprep.subr.mxu0 0.0
    %78 = vmatpush1.msra.mxu0 0.0
    %79 = vmatprep.subr.mxu0 0.0
    %80 = vmatpush1.msra.mxu0 0.0
    %81 = vmatprep.subr.mxu0 0.0
    %82 = vmatpush1.msra.mxu0 0.0
    %83 = vmatprep.subr.mxu0 0.0
    %84 = vmatpush1.msra.mxu0 0.0
    %85 = vmatprep.subr.mxu0 0.0
    %86 = vmatpush1.msra.mxu0 0.0
    %87 = vmatprep.subr.mxu0 0.0
    %88 = vmatpush1.msra.mxu0 %v30
    %89 = vmatprep.subr.mxu0 0.0
    %90 = vmatpush1.msra.mxu0 %v29
    %91 = vmatprep.subr.mxu0 0.0
    %92 = vmatpush2.msra.mxu0 0.0
    %93 = vmatprep.subr.mxu0 0.0
    %94 = vmatpush2.msra.mxu0 0.0
    %95 = vmatprep.subr.mxu0 0.0
    %96 = vmatpush2.msra.mxu0 0.0
    %97 = vmatprep.subr.mxu0 0.0
    %98 = vmatpush2.msra.mxu0 0.0
    %99 = vmatprep.subr.mxu0 0.0
    %100 = vmatpush2.msra.mxu0 0.0
    %101 = vmatprep.subr.mxu0 0.0
    %102 = vmatpush2.msra.mxu0 0.0
    %103 = vmatprep.subr.mxu0 0.0
    %104 = vmatpush2.msra.mxu0 0.0
    %105 = vmatprep.subr.mxu0 0.0
    %106 = vmatpush2.msra.mxu0 0.0
    %107 = vmatprep.subr.mxu0 0.0
    %108 = vmatpush2.msra.mxu0 0.0
    %109 = vmatprep.subr.mxu0 0.0
    %110 = vmatpush2.msra.mxu0 0.0
    %111 = vmatprep.subr.mxu0 0.0
    %112 = vmatpush2.msra.mxu0 0.0
    %113 = vmatprep.subr.mxu0 0.0
    %114 = vmatpush2.msra.mxu0 0.0
    %115 = vmatprep.subr.mxu0 0.0
    %116 = vmatpush2.msra.mxu0 0.0
    %117 = vmatprep.subr.mxu0 0.0
    %118 = vmatpush2.msra.mxu0 0.0
    %119 = vmatprep.subr.mxu0 0.0
    %120 = vmatpush2.msra.mxu0 0.0
    %121 = vmatprep.subr.mxu0 0.0
    %122 = vmatpush2.msra.mxu0 0.0
    %123 = vmatprep.mubr.f32.mxu0 0.0
    %124 = vmatmul.mubr.f32.gmra.mxu0 %v57
    %v125 = vpop.f32.mrf.mxu0
    %v126 = vadd.f32 0.0, %v125
    %v127 = vpop.f32.mrf.mxu0
    %128 = vdwg.mxu0
    %v129 = vadd.f32 %v41, %v126
    %v130 = vtanh.pop %v129
    %v132 = vsel %vm55, %v130, 0
    %134 = vmatprep.subr.mxu0 0.0
    %135 = vmatpush1.msra.mxu0 0.0
    %136 = vmatprep.subr.mxu0 0.0
    %137 = vmatpush1.msra.mxu0 0.0
    %138 = vmatprep.subr.mxu0 0.0
    %139 = vmatpush1.msra.mxu0 0.0
    %140 = vmatprep.subr.mxu0 0.0
    %141 = vmatpush1.msra.mxu0 0.0
    %142 = vmatprep.subr.mxu0 0.0
    %143 = vmatpush1.msra.mxu0 0.0
    %144 = vmatprep.subr.mxu0 0.0
    %145 = vmatpush1.msra.mxu0 0.0
    %146 = vmatprep.subr.mxu0 0.0
    %147 = vmatpush1.msra.mxu0 0.0
    %148 = vmatprep.subr.mxu0 0.0
    %149 = vmatpush1.msra.mxu0 0.0
    %150 = vmatprep.subr.mxu0 0.0
    %151 = vmatpush1.msra.mxu0 0.0
    %152 = vmatprep.subr.mxu0 0.0
    %153 = vmatpush1.msra.mxu0 0.0
    %154 = vmatprep.subr.mxu0 0.0
    %155 = vmatpush1.msra.mxu0 0.0
    %156 = vmatprep.subr.mxu0 0.0
    %157 = vmatpush1.msra.mxu0 0.0
    %158 = vmatprep.subr.mxu0 0.0
    %159 = vmatpush1.msra.mxu0 0.0
    %160 = vmatprep.subr.mxu0 0.0
    %161 = vmatpush1.msra.mxu0 0.0
    %162 = vmatprep.subr.mxu0 0.0
    %163 = vmatpush1.msra.mxu0 %v30
    %164 = vmatprep.subr.mxu0 0.0
    %165 = vmatpush1.msra.mxu0 %v29
    %166 = vmatprep.subr.mxu0 0.0
    %167 = vmatpush2.msra.mxu0 0.0
    %168 = vmatprep.subr.mxu0 0.0
    %169 = vmatpush2.msra.mxu0 0.0
    %170 = vmatprep.subr.mxu0 0.0
    %171 = vmatpush2.msra.mxu0 0.0
    %172 = vmatprep.subr.mxu0 0.0
    %173 = vmatpush2.msra.mxu0 0.0
    %174 = vmatprep.subr.mxu0 0.0
    %175 = vmatpush2.msra.mxu0 0.0
    %176 = vmatprep.subr.mxu0 0.0
    %177 = vmatpush2.msra.mxu0 0.0
    %178 = vmatprep.subr.mxu0 0.0
    %179 = vmatpush2.msra.mxu0 0.0
    %180 = vmatprep.subr.mxu0 0.0
    %181 = vmatpush2.msra.mxu0 0.0
    %182 = vmatprep.subr.mxu0 0.0
    %183 = vmatpush2.msra.mxu0 0.0
    %184 = vmatprep.subr.mxu0 0.0
    %185 = vmatpush2.msra.mxu0 0.0
    %186 = vmatprep.subr.mxu0 0.0
    %187 = vmatpush2.msra.mxu0 0.0
    %188 = vmatprep.subr.mxu0 0.0
    %189 = vmatpush2.msra.mxu0 0.0
    %190 = vmatprep.subr.mxu0 0.0
    %191 = vmatpush2.msra.mxu0 0.0
    %192 = vmatprep.subr.mxu0 0.0
    %193 = vmatpush2.msra.mxu0 0.0
    %194 = vmatprep.subr.mxu0 0.0
    %195 = vmatpush2.msra.mxu0 0.0
    %196 = vmatprep.subr.mxu0 0.0
    %197 = vmatpush2.msra.mxu0 0.0
    %198 = vmatprep.mubr.f32.mxu0 0.0
    %199 = vmatmul.mubr.f32.gmra.mxu0 %v132
    %v200 = vpop.f32.mrf.mxu0
    %v201 = vadd.f32 0.0, %v200
    %v202 = vpop.f32.mrf.mxu0
    %203 = vdwg.mxu0
    %v204 = vadd.f32 %v45, %v201
    %v205 = vtanh.pop %v204
    %v207 = vsel %vm55, %v205, 0
    %209 = vmatprep.subr.mxu0 0.0
    %210 = vmatpush1.msra.mxu0 0.0
    %211 = vmatprep.subr.mxu0 0.0
    %212 = vmatpush1.msra.mxu0 0.0
    %213 = vmatprep.subr.mxu0 0.0
    %214 = vmatpush1.msra.mxu0 0.0
    %215 = vmatprep.subr.mxu0 0.0
    %216 = vmatpush1.msra.mxu0 0.0
    %217 = vmatprep.subr.mxu0 0.0
    %218 = vmatpush1.msra.mxu0 0.0
    %219 = vmatprep.subr.mxu0 0.0
    %220 = vmatpush1.msra.mxu0 0.0
    %221 = vmatprep.subr.mxu0 0.0
    %222 = vmatpush1.msra.mxu0 0.0
    %223 = vmatprep.subr.mxu0 0.0
    %224 = vmatpush1.msra.mxu0 0.0
    %225 = vmatprep.subr.mxu0 0.0
    %226 = vmatpush1.msra.mxu0 0.0
    %227 = vmatprep.subr.mxu0 0.0
    %228 = vmatpush1.msra.mxu0 0.0
    %229 = vmatprep.subr.mxu0 0.0
    %230 = vmatpush1.msra.mxu0 0.0
    %231 = vmatprep.subr.mxu0 0.0
    %232 = vmatpush1.msra.mxu0 0.0
    %233 = vmatprep.subr.mxu0 0.0
    %234 = vmatpush1.msra.mxu0 0.0
    %235 = vmatprep.subr.mxu0 0.0
    %236 = vmatpush1.msra.mxu0 0.0
    %237 = vmatprep.subr.mxu0 0.0
    %238 = vmatpush1.msra.mxu0 %v30
    %239 = vmatprep.subr.mxu0 0.0
    %240 = vmatpush1.msra.mxu0 %v29
    %241 = vmatprep.subr.mxu0 0.0
    %242 = vmatpush2.msra.mxu0 0.0
    %243 = vmatprep.subr.mxu0 0.0
    %244 = vmatpush2.msra.mxu0 0.0
    %245 = vmatprep.subr.mxu0 0.0
    %246 = vmatpush2.msra.mxu0 0.0
    %247 = vmatprep.subr.mxu0 0.0
    %248 = vmatpush2.msra.mxu0 0.0
    %249 = vmatprep.subr.mxu0 0.0
    %250 = vmatpush2.msra.mxu0 0.0
    %251 = vmatprep.subr.mxu0 0.0
    %252 = vmatpush2.msra.mxu0 0.0
    %253 = vmatprep.subr.mxu0 0.0
    %254 = vmatpush2.msra.mxu0 0.0
    %255 = vmatprep.subr.mxu0 0.0
    %256 = vmatpush2.msra.mxu0 0.0
    %257 = vmatprep.subr.mxu0 0.0
    %258 = vmatpush2.msra.mxu0 0.0
    %259 = vmatprep.subr.mxu0 0.0
    %260 = vmatpush2.msra.mxu0 0.0
    %261 = vmatprep.subr.mxu0 0.0
    %262 = vmatpush2.msra.mxu0 0.0
    %263 = vmatprep.subr.mxu0 0.0
    %264 = vmatpush2.msra.mxu0 0.0
    %265 = vmatprep.subr.mxu0 0.0
    %266 = vmatpush2.msra.mxu0 0.0
    %267 = vmatprep.subr.mxu0 0.0
    %268 = vmatpush2.msra.mxu0 0.0
    %269 = vmatprep.subr.mxu0 0.0
    %270 = vmatpush2.msra.mxu0 0.0
    %271 = vmatprep.subr.mxu0 0.0
    %272 = vmatpush2.msra.mxu0 0.0
    %273 = vmatprep.mubr.f32.mxu0 0.0
    %274 = vmatmul.mubr.f32.gmra.mxu0 %v207
    %v275 = vpop.f32.mrf.mxu0
    %v276 = vadd.f32 0.0, %v275
    %v277 = vpop.f32.mrf.mxu0
    %278 = vdwg.mxu0
    %v279 = vadd.f32 %v49, %v276
    %v280 = vtanh.pop %v279
    %v282 = vsel %vm55, %v280, 0
    %284 = vmatprep.subr.mxu0 0.0
    %285 = vmatpush1.msra.mxu0 0.0
    %286 = vmatprep.subr.mxu0 0.0
    %287 = vmatpush1.msra.mxu0 0.0
    %288 = vmatprep.subr.mxu0 0.0
    %289 = vmatpush1.msra.mxu0 0.0
    %290 = vmatprep.subr.mxu0 0.0
    %291 = vmatpush1.msra.mxu0 0.0
    %292 = vmatprep.subr.mxu0 0.0
    %293 = vmatpush1.msra.mxu0 0.0
    %294 = vmatprep.subr.mxu0 0.0
    %295 = vmatpush1.msra.mxu0 0.0
    %296 = vmatprep.subr.mxu0 0.0
    %297 = vmatpush1.msra.mxu0 0.0
    %298 = vmatprep.subr.mxu0 0.0
    %299 = vmatpush1.msra.mxu0 0.0
    %300 = vmatprep.subr.mxu0 0.0
    %301 = vmatpush1.msra.mxu0 0.0
    %302 = vmatprep.subr.mxu0 0.0
    %303 = vmatpush1.msra.mxu0 0.0
    %304 = vmatprep.subr.mxu0 0.0
    %305 = vmatpush1.msra.mxu0 0.0
    %306 = vmatprep.subr.mxu0 0.0
    %307 = vmatpush1.msra.mxu0 0.0
    %308 = vmatprep.subr.mxu0 0.0
    %309 = vmatpush1.msra.mxu0 0.0
    %310 = vmatprep.subr.mxu0 0.0
    %311 = vmatpush1.msra.mxu0 0.0
    %312 = vmatprep.subr.mxu0 0.0
    %313 = vmatpush1.msra.mxu0 %v30
    %314 = vmatprep.subr.mxu0 0.0
    %315 = vmatpush1.msra.mxu0 %v29
    %316 = vmatprep.subr.mxu0 0.0
    %317 = vmatpush2.msra.mxu0 0.0
    %318 = vmatprep.subr.mxu0 0.0
    %319 = vmatpush2.msra.mxu0 0.0
    %320 = vmatprep.subr.mxu0 0.0
    %321 = vmatpush2.msra.mxu0 0.0
    %322 = vmatprep.subr.mxu0 0.0
    %323 = vmatpush2.msra.mxu0 0.0
    %324 = vmatprep.subr.mxu0 0.0
    %325 = vmatpush2.msra.mxu0 0.0
    %326 = vmatprep.subr.mxu0 0.0
    %327 = vmatpush2.msra.mxu0 0.0
    %328 = vmatprep.subr.mxu0 0.0
    %329 = vmatpush2.msra.mxu0 0.0
    %330 = vmatprep.subr.mxu0 0.0
    %331 = vmatpush2.msra.mxu0 0.0
    %332 = vmatprep.subr.mxu0 0.0
    %333 = vmatpush2.msra.mxu0 0.0
    %334 = vmatprep.subr.mxu0 0.0
    %335 = vmatpush2.msra.mxu0 0.0
    %336 = vmatprep.subr.mxu0 0.0
    %337 = vmatpush2.msra.mxu0 0.0
    %338 = vmatprep.subr.mxu0 0.0
    %339 = vmatpush2.msra.mxu0 0.0
    %340 = vmatprep.subr.mxu0 0.0
    %341 = vmatpush2.msra.mxu0 0.0
    %342 = vmatprep.subr.mxu0 0.0
    %343 = vmatpush2.msra.mxu0 0.0
    %344 = vmatprep.subr.mxu0 0.0
    %345 = vmatpush2.msra.mxu0 0.0
    %346 = vmatprep.subr.mxu0 0.0
    %347 = vmatpush2.msra.mxu0 0.0
    %348 = vmatprep.mubr.f32.mxu0 0.0
    %349 = vmatmul.mubr.f32.gmra.mxu0 %v282
    %v350 = vpop.f32.mrf.mxu0
    %v351 = vadd.f32 0.0, %v350
    %v352 = vpop.f32.mrf.mxu0
    %353 = vdwg.mxu0
    %v354 = vadd.f32 %v53, %v351
    %v355 = vtanh.pop %v354
    %v356 = vrot.slane %v130, 7
    %v358 = vrot.slane %v205, 6
    %v360 = vrot.slane %v280, 5
    %v363 = vrot.slane %v355, 4
    %vm365 = vcmask 1040384
    %v366 = vsel %vm365, %v54, %v356
    %vm367 = vcmask 1041408
    %v368 = vsel %vm367, %v366, %v358
    %vm369 = vcmask 1042432
    %v370 = vsel %vm369, %v368, %v360
    %vm371 = vcmask 1043456
    %v372 = vsel %vm371, %v370, %v363
    %s373 = sld [smem:[#allocation2]]
    %v374 = vstv %s373
    %v376 = vsel %vm55, %v33, 0
    %v379 = vsel %vm55, %v372, 0
    %381 = vmatprep.subr.mxu0 0.0
    %382 = vmatpush1.xpose.msra.mxu0 0.0
    %383 = vmatprep.subr.mxu0 0.0
    %384 = vmatpush1.xpose.msra.mxu0 0.0
    %385 = vmatprep.subr.mxu0 0.0
    %386 = vmatpush1.xpose.msra.mxu0 0.0
    %387 = vmatprep.subr.mxu0 0.0
    %388 = vmatpush1.xpose.msra.mxu0 0.0
    %389 = vmatprep.subr.mxu0 0.0
    %390 = vmatpush1.xpose.msra.mxu0 0.0
    %391 = vmatprep.subr.mxu0 0.0
    %392 = vmatpush1.xpose.msra.mxu0 0.0
    %393 = vmatprep.subr.mxu0 0.0
    %394 = vmatpush1.xpose.msra.mxu0 0.0
    %395 = vmatprep.subr.mxu0 0.0
    %396 = vmatpush1.xpose.msra.mxu0 0.0
    %397 = vmatprep.subr.mxu0 0.0
    %398 = vmatpush1.xpose.msra.mxu0 0.0
    %399 = vmatprep.subr.mxu0 0.0
    %400 = vmatpush1.xpose.msra.mxu0 0.0
    %401 = vmatprep.subr.mxu0 0.0
    %402 = vmatpush1.xpose.msra.mxu0 0.0
    %403 = vmatprep.subr.mxu0 0.0
    %404 = vmatpush1.xpose.msra.mxu0 0.0
    %405 = vmatprep.subr.mxu0 0.0
    %406 = vmatpush1.xpose.msra.mxu0 0.0
    %407 = vmatprep.subr.mxu0 0.0
    %408 = vmatpush1.xpose.msra.mxu0 0.0
    %409 = vmatprep.subr.mxu0 0.0
    %410 = vmatpush1.xpose.msra.mxu0 0.0
    %411 = vmatprep.subr.mxu0 0.0
    %412 = vmatpush1.xpose.msra.mxu0 %v379
    %413 = vmatprep.subr.mxu0 0.0
    %414 = vmatpush2.xpose.msra.mxu0 0.0
    %415 = vmatprep.subr.mxu0 0.0
    %416 = vmatpush2.xpose.msra.mxu0 0.0
    %417 = vmatprep.subr.mxu0 0.0
    %418 = vmatpush2.xpose.msra.mxu0 0.0
    %419 = vmatprep.subr.mxu0 0.0
    %420 = vmatpush2.xpose.msra.mxu0 0.0
    %421 = vmatprep.subr.mxu0 0.0
    %422 = vmatpush2.xpose.msra.mxu0 0.0
    %423 = vmatprep.subr.mxu0 0.0
    %424 = vmatpush2.xpose.msra.mxu0 0.0
    %425 = vmatprep.subr.mxu0 0.0
    %426 = vmatpush2.xpose.msra.mxu0 0.0
    %427 = vmatprep.subr.mxu0 0.0
    %428 = vmatpush2.xpose.msra.mxu0 0.0
    %429 = vmatprep.subr.mxu0 0.0
    %430 = vmatpush2.xpose.msra.mxu0 0.0
    %431 = vmatprep.subr.mxu0 0.0
    %432 = vmatpush2.xpose.msra.mxu0 0.0
    %433 = vmatprep.subr.mxu0 0.0
    %434 = vmatpush2.xpose.msra.mxu0 0.0
    %435 = vmatprep.subr.mxu0 0.0
    %436 = vmatpush2.xpose.msra.mxu0 0.0
    %437 = vmatprep.subr.mxu0 0.0
    %438 = vmatpush2.xpose.msra.mxu0 0.0
    %439 = vmatprep.subr.mxu0 0.0
    %440 = vmatpush2.xpose.msra.mxu0 0.0
    %441 = vmatprep.subr.mxu0 0.0
    %442 = vmatpush2.xpose.msra.mxu0 0.0
    %443 = vmatprep.subr.mxu0 0.0
    %444 = vmatpush2.xpose.msra.mxu0 0.0
    %445 = vmatprep.mubr.f32.mxu0 0.0
    %446 = vmatmul.mubr.f32.gmra.mxu0 %v376
    %v447 = vpop.f32.mrf.mxu0
    %v448 = vadd.f32 %v374, %v447
    %v449 = vpop.f32.mrf.mxu0
    %450 = vdwg.mxu0
    %vm451 = vcmask 32768
    %452 = vst.msk [vmem:[#allocation6] sm:$0x1] %vm451, %v448
    // Predicated region
    $region18: #{simple_rnn_forward.1} parent=1 // pred_check
      _
    $region19: #{simple_rnn_forward.1} parent=1 // pred_check_branch
      %454 = sbr.rel (0) target = $region21
    $region20: #{simple_rnn_forward.1} parent=1 // pred_region
      %s456 = ssub.s32 16, 16
      %457 = vsyncadd [#allocation4], %s456
      %s459 = sshll.u32 [#allocation6], 4
      %s460 = int_to_ptr.vmem [resolvable:$true] %s459
      %462 = dma.vmem_to_hbm [thread:$0]  %s460, 16, %s3, [#allocation4]
    $region21: #{simple_rnn_forward.1} parent=1 // pred_fallthru
      _
    // Predicated region
    $region22: #{simple_rnn_forward.1} parent=1 // pred_check
      _
    $region23: #{simple_rnn_forward.1} parent=1 // pred_check_branch
      %464 = sbr.rel (0) target = $region25
    $region24: #{simple_rnn_forward.1} parent=1 // pred_region
      %465 = dma.done [#allocation4], 16
    $region25: #{simple_rnn_forward.1} parent=1 // pred_fallthru
      _
    %466 = vsyncpa [#allocation4], 1
    %467 = vsyncpa [#allocation5], 1

</llo_original>
